<compile_context>
chip_gen: v6e
topology: v6e:2x2x1
jax: 0.10.0
libtpu: 0.0.40
codegen_flags: <defaults>
</compile_context>

<pallas_src>
import functools

import jax
import jax.numpy as jnp
from jax.experimental import pallas as pl
from jax.experimental.pallas import tpu as pltpu


def _dann_classifier_kernel(x_ref, w1_ref, b1_ref, w2_ref, b2_ref,
                            w3_ref, b3_ref, out_ref):
    """Fused 3-layer MLP: fc1 -> ReLU -> fc2 -> ReLU -> fc3 (logits)."""
    # In-kernel cast: x arrives as f32 (single HBM read), bf16 only for the MXU.
    x = x_ref[...].astype(w1_ref.dtype)                             # (bm, D_in) bf16

    # fc1 + ReLU: bf16 MXU matmul, f32 accumulation; bias/ReLU in f32 (VPU).
    h1 = jnp.dot(x, w1_ref[...], preferred_element_type=jnp.float32)
    h1 = jnp.maximum(h1 + b1_ref[...], 0.0)                         # (bm, H) f32
    h1 = h1.astype(w2_ref.dtype)                                    # back to bf16 for MXU

    # fc2 + ReLU
    h2 = jnp.dot(h1, w2_ref[...], preferred_element_type=jnp.float32)
    h2 = jnp.maximum(h2 + b2_ref[...], 0.0)                         # (bm, H) f32
    h2 = h2.astype(w3_ref.dtype)

    # fc3 (2 logit columns, no activation) — tiny masked store, negligible.
    logits = jnp.dot(h2, w3_ref[...], preferred_element_type=jnp.float32)
    out_ref[...] = (logits + b3_ref[...]).astype(out_ref.dtype)     # (bm, 2)


def prepare_params(w1, b1, w2, b2, w3, b3):
    """One-time parameter prep (do NOT call per forward pass).

    Weights (in_features, out_features) -> bf16 MXU operands;
    biases -> f32, reshaped to (1, out_features) for VMEM broadcast.
    """
    bf = jnp.bfloat16
    f32 = jnp.float32
    return (w1.astype(bf), b1.reshape(1, -1).astype(f32),
            w2.astype(bf), b2.reshape(1, -1).astype(f32),
            w3.astype(bf), b3.reshape(1, -1).astype(f32))


@functools.partial(jax.jit, static_argnames=("block_m",))
def dann_domain_classifier(x, w1, b1, w2, b2, w3, b3, *, block_m=512):
    """x: (B, input_dim) f32; params from prepare_params(). Returns (B, 2) f32 logits."""
    B, d_in = x.shape
    d_h = w1.shape[1]
    n_out = w3.shape[1]

    # Batch tiling: sublane-aligned tile, whole batch in one step when small,
    # else block_m-row tiles.  Ragged last block is masked by Pallas (no jnp.pad).
    b8 = ((B + 7) // 8) * 8
    bm = min(block_m, b8)
    grid_m = pl.cdiv(B, bm)

    full = lambda i: (0, 0)   # weights/biases: same (whole) block every grid step

    flops = 2 * B * (d_in * d_h + d_h * d_h + d_h * n_out)
    bytes_accessed = (x.size * 4 + (w1.size + w2.size + w3.size) * 2
                      + (b1.size + b2.size + b3.size) * 4 + B * n_out * 4)

    out = pl.pallas_call(
        _dann_classifier_kernel,
        out_shape=jax.ShapeDtypeStruct((B, n_out), jnp.float32),
        grid_spec=pl.GridSpec(
            grid=(grid_m,),
            in_specs=[
                pl.BlockSpec((bm, d_in), lambda i: (i, 0)),   # x tile (f32)
                pl.BlockSpec((d_in, d_h), full),              # W1 (bf16)
                pl.BlockSpec((1, d_h), full),                 # b1 (f32)
                pl.BlockSpec((d_h, d_h), full),               # W2 (bf16)
                pl.BlockSpec((1, d_h), full),                 # b2 (f32)
                pl.BlockSpec((d_h, n_out), full),             # W3 (bf16)
                pl.BlockSpec((1, n_out), full),               # b3 (f32)
            ],
            out_specs=pl.BlockSpec((bm, n_out), lambda i: (i, 0)),
        ),
        compiler_params=pltpu.CompilerParams(
            dimension_semantics=("parallel",)),
        cost_estimate=pl.CostEstimate(
            flops=flops, transcendentals=0, bytes_accessed=bytes_accessed),
    )(x, w1, b1, w2, b2, w3, b3)

    return out


def _init_linear(key, fan_in, fan_out):
    """Deterministic init mimicking nn.Linear's U(-1/sqrt(fan_in), 1/sqrt(fan_in)).

    Weight returned as (fan_in, fan_out) == PyTorch weight.T (see layout comment).
    """
    kw, kb = jax.random.split(key)
    bound = 1.0 / jnp.sqrt(jnp.float32(fan_in))
    w = jax.random.uniform(kw, (fan_in, fan_out), jnp.float32, -bound, bound)
    b = jax.random.uniform(kb, (fan_out,), jnp.float32, -bound, bound)
    return w, b


if __name__ == "__main__":
    # Small shapes consistent with the module (input_dim, hidden_dim are ctor args).
    batch, input_dim, hidden_dim, num_classes = 16, 256, 128, 2

    root = jax.random.PRNGKey(0)
    kx, k1, k2, k3 = jax.random.split(root, 4)

    x = jax.random.normal(kx, (batch, input_dim), jnp.float32)
    w1, b1 = _init_linear(k1, input_dim, hidden_dim)
    w2, b2 = _init_linear(k2, hidden_dim, hidden_dim)
    w3, b3 = _init_linear(k3, hidden_dim, num_classes)

    params = prepare_params(w1, b1, w2, b2, w3, b3)   # one-time weight prep

    out = dann_domain_classifier(x, *params)
    out = jax.block_until_ready(out)
    assert out.shape == (batch, num_classes)

    # Reference with the same bf16-operand / f32-accumulate recipe (tight check).
    bf = jnp.bfloat16
    h = jnp.maximum(jnp.dot(x.astype(bf), w1.astype(bf),
                            preferred_element_type=jnp.float32) + b1, 0.0)
    h = jnp.maximum(jnp.dot(h.astype(bf), w2.astype(bf),
                            preferred_element_type=jnp.float32) + b2, 0.0)
    ref_bf16 = jnp.dot(h.astype(bf), w3.astype(bf),
                       preferred_element_type=jnp.float32) + b3
    assert jnp.allclose(out, ref_bf16, atol=2e-3, rtol=2e-3), "mismatch vs bf16 reference"

    # Pure-f32 reference (loose check: bounds the documented bf16-cast error).
    ref_f32 = jnp.maximum(x @ w1 + b1, 0.0)
    ref_f32 = jnp.maximum(ref_f32 @ w2 + b2, 0.0)
    ref_f32 = ref_f32 @ w3 + b3
    assert jnp.allclose(out, ref_f32, atol=5e-2, rtol=5e-2), "mismatch vs f32 reference"

    print("KERNEL_OK")
</pallas_src>

<mosaic_0001>
module attributes {stable_mosaic.version = 11 : i64} {
  func.func @_dann_classifier_kernel(%arg0: i32, %arg1: memref<16x256xf32, #tpu.memory_space<vmem>>, %arg2: memref<256x128xbf16, #tpu.memory_space<vmem>>, %arg3: memref<1x128xf32, #tpu.memory_space<vmem>>, %arg4: memref<128x128xbf16, #tpu.memory_space<vmem>>, %arg5: memref<1x128xf32, #tpu.memory_space<vmem>>, %arg6: memref<128x2xbf16, #tpu.memory_space<vmem>>, %arg7: memref<1x2xf32, #tpu.memory_space<vmem>>, %arg8: memref<16x2xf32, #tpu.memory_space<vmem>>) attributes {dimension_semantics = [#tpu.dimension_semantics<parallel>], iteration_bounds = array<i64: 1>, scalar_prefetch = 0 : i64, scratch_operands = 0 : i64, tpu.core_type = #tpu.core_type<tc>, window_params = [{transform_indices = @transform_0, window_bounds = array<i64: 16, 256>}, {pipeline_mode = #tpu.pipeline_mode<synchronous>, transform_indices = @transform_1, window_bounds = array<i64: 256, 128>}, {pipeline_mode = #tpu.pipeline_mode<synchronous>, transform_indices = @transform_2, window_bounds = array<i64: 1, 128>}, {pipeline_mode = #tpu.pipeline_mode<synchronous>, transform_indices = @transform_3, window_bounds = array<i64: 128, 128>}, {pipeline_mode = #tpu.pipeline_mode<synchronous>, transform_indices = @transform_4, window_bounds = array<i64: 1, 128>}, {pipeline_mode = #tpu.pipeline_mode<synchronous>, transform_indices = @transform_5, window_bounds = array<i64: 128, 2>}, {pipeline_mode = #tpu.pipeline_mode<synchronous>, transform_indices = @transform_6, window_bounds = array<i64: 1, 2>}, {transform_indices = @transform_7, window_bounds = array<i64: 16, 2>}]} {
    %c0 = arith.constant 0 : index
    %c0_0 = arith.constant 0 : index
    %0 = vector.load %arg1[%c0, %c0_0] : memref<16x256xf32, #tpu.memory_space<vmem>>, vector<16x256xf32>
    %1 = arith.truncf %0 : vector<16x256xf32> to vector<16x256xbf16>
    %c0_1 = arith.constant 0 : index
    %c0_2 = arith.constant 0 : index
    %2 = vector.load %arg2[%c0_1, %c0_2] : memref<256x128xbf16, #tpu.memory_space<vmem>>, vector<256x128xbf16>
    %cst = arith.constant dense<0.000000e+00> : vector<16x128xf32>
    %3 = tpu.matmul %1, %2, %cst {dimension_numbers = #tpu.dot_dimension_numbers<[1], [0], [0], [1], [0, 0, 1, 1], [], []>} : vector<16x256xbf16>, vector<256x128xbf16>, vector<16x128xf32> -> vector<16x128xf32>
    %c0_3 = arith.constant 0 : index
    %c0_4 = arith.constant 0 : index
    %4 = vector.load %arg3[%c0_3, %c0_4] : memref<1x128xf32, #tpu.memory_space<vmem>>, vector<1x128xf32>
    %5 = vector.broadcast %4 : vector<1x128xf32> to vector<16x128xf32>
    %6 = arith.addf %3, %5 : vector<16x128xf32>
    %cst_5 = arith.constant 0.000000e+00 : f32
    %7 = vector.broadcast %cst_5 : f32 to vector<16x128xf32>
    %8 = arith.maximumf %6, %7 : vector<16x128xf32>
    %9 = arith.truncf %8 : vector<16x128xf32> to vector<16x128xbf16>
    %c0_6 = arith.constant 0 : index
    %c0_7 = arith.constant 0 : index
    %10 = vector.load %arg4[%c0_6, %c0_7] : memref<128x128xbf16, #tpu.memory_space<vmem>>, vector<128x128xbf16>
    %cst_8 = arith.constant dense<0.000000e+00> : vector<16x128xf32>
    %11 = tpu.matmul %9, %10, %cst_8 {dimension_numbers = #tpu.dot_dimension_numbers<[1], [0], [0], [1], [0, 0, 1, 1], [], []>} : vector<16x128xbf16>, vector<128x128xbf16>, vector<16x128xf32> -> vector<16x128xf32>
    %c0_9 = arith.constant 0 : index
    %c0_10 = arith.constant 0 : index
    %12 = vector.load %arg5[%c0_9, %c0_10] : memref<1x128xf32, #tpu.memory_space<vmem>>, vector<1x128xf32>
    %13 = vector.broadcast %12 : vector<1x128xf32> to vector<16x128xf32>
    %14 = arith.addf %11, %13 : vector<16x128xf32>
    %cst_11 = arith.constant 0.000000e+00 : f32
    %15 = vector.broadcast %cst_11 : f32 to vector<16x128xf32>
    %16 = arith.maximumf %14, %15 : vector<16x128xf32>
    %17 = arith.truncf %16 : vector<16x128xf32> to vector<16x128xbf16>
    %c0_12 = arith.constant 0 : index
    %c0_13 = arith.constant 0 : index
    %18 = vector.load %arg6[%c0_12, %c0_13] : memref<128x2xbf16, #tpu.memory_space<vmem>>, vector<128x2xbf16>
    %cst_14 = arith.constant dense<0.000000e+00> : vector<16x2xf32>
    %19 = tpu.matmul %17, %18, %cst_14 {dimension_numbers = #tpu.dot_dimension_numbers<[1], [0], [0], [1], [0, 0, 1, 1], [], []>} : vector<16x128xbf16>, vector<128x2xbf16>, vector<16x2xf32> -> vector<16x2xf32>
    %c0_15 = arith.constant 0 : index
    %c0_16 = arith.constant 0 : index
    %20 = vector.load %arg7[%c0_15, %c0_16] : memref<1x2xf32, #tpu.memory_space<vmem>>, vector<1x2xf32>
    %21 = vector.broadcast %20 : vector<1x2xf32> to vector<16x2xf32>
    %22 = arith.addf %19, %21 : vector<16x2xf32>
    %c0_17 = arith.constant 0 : index
    %c0_18 = arith.constant 0 : index
    %23 = vector.load %arg8[%c0_17, %c0_18] : memref<16x2xf32, #tpu.memory_space<vmem>>, vector<16x2xf32>
    tpu.vector_store %arg8[%c0_17, %c0_18], %22 {strides = array<i32>} : memref<16x2xf32, #tpu.memory_space<vmem>>, vector<16x2xf32>,
    return
  }
  func.func @transform_0(%arg0: i32) -> (i32, i32) {
    %c0_i32 = arith.constant 0 : i32
    %c0_i32_0 = arith.constant 0 : i32
    return %arg0, %c0_i32 : i32, i32
  }
  func.func @transform_1(%arg0: i32) -> (i32, i32) {
    %c0_i32 = arith.constant 0 : i32
    %c0_i32_0 = arith.constant 0 : i32
    %c0_i32_1 = arith.constant 0 : i32
    return %c0_i32, %c0_i32_0 : i32, i32
  }
  func.func @transform_2(%arg0: i32) -> (i32, i32) {
    %c0_i32 = arith.constant 0 : i32
    %c0_i32_0 = arith.constant 0 : i32
    %c0_i32_1 = arith.constant 0 : i32
    return %c0_i32, %c0_i32_0 : i32, i32
  }
  func.func @transform_3(%arg0: i32) -> (i32, i32) {
    %c0_i32 = arith.constant 0 : i32
    %c0_i32_0 = arith.constant 0 : i32
    %c0_i32_1 = arith.constant 0 : i32
    return %c0_i32, %c0_i32_0 : i32, i32
  }
  func.func @transform_4(%arg0: i32) -> (i32, i32) {
    %c0_i32 = arith.constant 0 : i32
    %c0_i32_0 = arith.constant 0 : i32
    %c0_i32_1 = arith.constant 0 : i32
    return %c0_i32, %c0_i32_0 : i32, i32
  }
  func.func @transform_5(%arg0: i32) -> (i32, i32) {
    %c0_i32 = arith.constant 0 : i32
    %c0_i32_0 = arith.constant 0 : i32
    %c0_i32_1 = arith.constant 0 : i32
    return %c0_i32, %c0_i32_0 : i32, i32
  }
  func.func @transform_6(%arg0: i32) -> (i32, i32) {
    %c0_i32 = arith.constant 0 : i32
    %c0_i32_0 = arith.constant 0 : i32
    %c0_i32_1 = arith.constant 0 : i32
    return %c0_i32, %c0_i32_0 : i32, i32
  }
  func.func @transform_7(%arg0: i32) -> (i32, i32) {
    %c0_i32 = arith.constant 0 : i32
    %c0_i32_0 = arith.constant 0 : i32
    return %arg0, %c0_i32 : i32, i32
  }
}

</mosaic_0001>

<llo_original>
// kernel: dann_domain_classifier.1
$region0: #{dann_domain_classifier.1}
  #allocation0 [shape = 'u32[]', space=smem, size = 0x4, offset = 0x4, fixed_abs, tag = 'smem constant byte address 0x4 - core index']
  #allocation1 [shape = 'u32[144,128]{1,0:T(1,128)}', space=vmem, size = 0x12000, scoped, tag = 'internal scratch']
  %s0 = inlined_call_operand.hbm [shape: f32[16,256], index: 0, kind: input, shape index: {}]
  %s1 = inlined_call_operand.hbm [shape: bf16[256,128], index: 1, kind: input, shape index: {}]
  %s2 = inlined_call_operand.vmem [shape: f32[1,128], index: 2, kind: input, shape index: {}]
  %s3 = inlined_call_operand.vmem [shape: bf16[128,128], index: 3, kind: input, shape index: {}]
  %s4 = inlined_call_operand.vmem [shape: f32[1,128], index: 4, kind: input, shape index: {}]
  %s5 = inlined_call_operand.vmem [shape: bf16[128,2], index: 5, kind: input, shape index: {}]
  %s6 = inlined_call_operand.vmem [shape: f32[1,2], index: 6, kind: input, shape index: {}]
  %s7 = inlined_call_operand.vmem [shape: f32[16,2], index: 7, kind: output, shape index: {}]
  %s8 = sld [smem:[#allocation0]]
  $region46: #{dann_domain_classifier.1} parent=0
    _
  %s10 = ssub.s32 1, %s8
  %s11 = scalar_select 0, %s10, %s8
  $region1: #{dann_domain_classifier.1} parent=0
    #allocation2 [shape = 'u8[16384]{0}', space=vmem, size = 0x4000, scoped, tag = 'input window, operand 0, single buffered']
    #allocation3 [shape = 's32[1]{0}', space=sflag, size = 0x4, scoped, tag = 'scoped memory for dann_domain_classifier.1']
    #allocation4 [shape = 'u8[65536]{0}', space=vmem, size = 0x10000, scoped, tag = 'input window, operand 1, single buffered']
    #allocation5 [shape = 's32[1]{0}', space=sflag, size = 0x4, scoped, tag = 'scoped memory for dann_domain_classifier.1']
    %12 = vsyncpa [#allocation3], 0
    %13 = vsyncpa [#allocation5], 0
    // Predicated region
    $region2: #{dann_domain_classifier.1} parent=1 // pred_check
      _
    $region3: #{dann_domain_classifier.1} parent=1 // pred_check_branch
      %15 = sbr.rel (0) target = $region5
    $region4: #{dann_domain_classifier.1} parent=1 // pred_region
      %s17 = ssub.s32 512, 512
      %18 = vsyncadd [#allocation3], %s17
      %s19 = sshll.u32 [#allocation2], 4
      %s20 = int_to_ptr.vmem [resolvable:$true] %s19
      %25 = dma.hbm_to_vmem [thread:$0]  %s0, 512, %s20, [#allocation3], 256, 256, 16
    $region5: #{dann_domain_classifier.1} parent=1 // pred_fallthru
      _
    // Predicated region
    $region6: #{dann_domain_classifier.1} parent=1 // pred_check
      _
    $region7: #{dann_domain_classifier.1} parent=1 // pred_check_branch
      %27 = sbr.rel (0) target = $region9
    $region8: #{dann_domain_classifier.1} parent=1 // pred_region
      %s29 = ssub.s32 2048, 2048
      %30 = vsyncadd [#allocation5], %s29
      %s31 = sshll.u32 [#allocation4], 4
      %s32 = int_to_ptr.vmem [resolvable:$true] %s31
      %37 = dma.hbm_to_vmem [thread:$0]  %s1, 2048, %s32, [#allocation5], 64, 64, 4
    $region9: #{dann_domain_classifier.1} parent=1 // pred_fallthru
      _
    // Predicated region
    $region10: #{dann_domain_classifier.1} parent=1 // pred_check
      _
    $region11: #{dann_domain_classifier.1} parent=1 // pred_check_branch
      %39 = sbr.rel (0) target = $region13
    $region12: #{dann_domain_classifier.1} parent=1 // pred_region
      _
    $region13: #{dann_domain_classifier.1} parent=1 // pred_fallthru
      _
    // Predicated region
    $region14: #{dann_domain_classifier.1} parent=1 // pred_check
      _
    $region15: #{dann_domain_classifier.1} parent=1 // pred_check_branch
      %41 = sbr.rel (0) target = $region17
    $region16: #{dann_domain_classifier.1} parent=1 // pred_region
      _
    $region17: #{dann_domain_classifier.1} parent=1 // pred_fallthru
      _
    // Predicated region
    $region18: #{dann_domain_classifier.1} parent=1 // pred_check
      _
    $region19: #{dann_domain_classifier.1} parent=1 // pred_check_branch
      %43 = sbr.rel (0) target = $region21
    $region20: #{dann_domain_classifier.1} parent=1 // pred_region
      _
    $region21: #{dann_domain_classifier.1} parent=1 // pred_fallthru
      _
    // Predicated region
    $region22: #{dann_domain_classifier.1} parent=1 // pred_check
      _
    $region23: #{dann_domain_classifier.1} parent=1 // pred_check_branch
      %45 = sbr.rel (0) target = $region25
    $region24: #{dann_domain_classifier.1} parent=1 // pred_region
      _
    $region25: #{dann_domain_classifier.1} parent=1 // pred_fallthru
      _
    // Predicated region
    $region26: #{dann_domain_classifier.1} parent=1 // pred_check
      _
    $region27: #{dann_domain_classifier.1} parent=1 // pred_check_branch
      %47 = sbr.rel (0) target = $region29
    $region28: #{dann_domain_classifier.1} parent=1 // pred_region
      _
    $region29: #{dann_domain_classifier.1} parent=1 // pred_fallthru
      _
    // Predicated region
    $region30: #{dann_domain_classifier.1} parent=1 // pred_check
      _
    $region31: #{dann_domain_classifier.1} parent=1 // pred_check_branch
      %49 = sbr.rel (0) target = $region33
    $region32: #{dann_domain_classifier.1} parent=1 // pred_region
      %50 = dma.done [#allocation3], 512
    $region33: #{dann_domain_classifier.1} parent=1 // pred_fallthru
      _
    // Predicated region
    $region34: #{dann_domain_classifier.1} parent=1 // pred_check
      _
    $region35: #{dann_domain_classifier.1} parent=1 // pred_check_branch
      %52 = sbr.rel (0) target = $region37
    $region36: #{dann_domain_classifier.1} parent=1 // pred_region
      %53 = dma.done [#allocation5], 2048
    $region37: #{dann_domain_classifier.1} parent=1 // pred_fallthru
      _
    %v55 = vld [vmem:[#allocation2] sm:$0xff]
    %v56 = vld [vmem:[#allocation2 + $0x8] sm:$0xff]
    %v57 = vld [vmem:[#allocation2 + $0x10] sm:$0xff]
    %v58 = vld [vmem:[#allocation2 + $0x18] sm:$0xff]
    %v59 = vpack.c.bf16 %v57, %v55
    %v60 = vpack.c.bf16 %v58, %v56
    %v61 = vld [vmem:[#allocation4] sm:$0xf]
    %v62 = vld [vmem:[#allocation4 + $0x4] sm:$0xf]
    %v63 = vld [vmem:[#allocation4 + $0x8] sm:$0xf]
    %v64 = vld [vmem:[#allocation4 + $0xc] sm:$0xf]
    %v65 = vld [vmem:[#allocation4 + $0x10] sm:$0xf]
    %v66 = vld [vmem:[#allocation4 + $0x14] sm:$0xf]
    %v67 = vld [vmem:[#allocation4 + $0x18] sm:$0xf]
    %v68 = vld [vmem:[#allocation4 + $0x1c] sm:$0xf]
    %v69 = vld [vmem:[#allocation4 + $0x20] sm:$0xf]
    %v70 = vld [vmem:[#allocation4 + $0x24] sm:$0xf]
    %v71 = vld [vmem:[#allocation4 + $0x28] sm:$0xf]
    %v72 = vld [vmem:[#allocation4 + $0x2c] sm:$0xf]
    %v73 = vld [vmem:[#allocation4 + $0x30] sm:$0xf]
    %v74 = vld [vmem:[#allocation4 + $0x34] sm:$0xf]
    %v75 = vld [vmem:[#allocation4 + $0x38] sm:$0xf]
    %v76 = vld [vmem:[#allocation4 + $0x3c] sm:$0xf]
    %v77 = vld [vmem:[#allocation4 + $0x40] sm:$0xf]
    %v78 = vld [vmem:[#allocation4 + $0x44] sm:$0xf]
    %v79 = vld [vmem:[#allocation4 + $0x48] sm:$0xf]
    %v80 = vld [vmem:[#allocation4 + $0x4c] sm:$0xf]
    %v81 = vld [vmem:[#allocation4 + $0x50] sm:$0xf]
    %v82 = vld [vmem:[#allocation4 + $0x54] sm:$0xf]
    %v83 = vld [vmem:[#allocation4 + $0x58] sm:$0xf]
    %v84 = vld [vmem:[#allocation4 + $0x5c] sm:$0xf]
    %v85 = vld [vmem:[#allocation4 + $0x60] sm:$0xf]
    %v86 = vld [vmem:[#allocation4 + $0x64] sm:$0xf]
    %v87 = vld [vmem:[#allocation4 + $0x68] sm:$0xf]
    %v88 = vld [vmem:[#allocation4 + $0x6c] sm:$0xf]
    %v89 = vld [vmem:[#allocation4 + $0x70] sm:$0xf]
    %v90 = vld [vmem:[#allocation4 + $0x74] sm:$0xf]
    %v91 = vld [vmem:[#allocation4 + $0x78] sm:$0xf]
    %v92 = vld [vmem:[#allocation4 + $0x7c] sm:$0xf]
    %v93 = vld [vmem:[%s2] sm:$0x1]
    %v95 = vlaneseq
    %v96 = vshrl.u32 %v95, 7
    %v97 = vsub.s32 0, %v96
    %v98 = vrot.slane %v93, %v97
    %v132 = vunpack.c.l.b16 %v61
    %v133 = vunpack.c.l.b16 %v62
    %v134 = vunpack.c.l.b16 %v63
    %v135 = vunpack.c.l.b16 %v64
    %v136 = vunpack.c.l.b16 %v65
    %v137 = vunpack.c.l.b16 %v66
    %v138 = vunpack.c.l.b16 %v67
    %v139 = vunpack.c.l.b16 %v68
    %v140 = vunpack.c.l.b16 %v69
    %v141 = vunpack.c.l.b16 %v70
    %v142 = vunpack.c.l.b16 %v71
    %v143 = vunpack.c.l.b16 %v72
    %v144 = vunpack.c.l.b16 %v73
    %v145 = vunpack.c.l.b16 %v74
    %v146 = vunpack.c.l.b16 %v75
    %v147 = vunpack.c.l.b16 %v76
    %v148 = vunpack.c.l.b16 %v77
    %v149 = vunpack.c.l.b16 %v78
    %v150 = vunpack.c.l.b16 %v79
    %v151 = vunpack.c.l.b16 %v80
    %v152 = vunpack.c.l.b16 %v81
    %v153 = vunpack.c.l.b16 %v82
    %v154 = vunpack.c.l.b16 %v83
    %v155 = vunpack.c.l.b16 %v84
    %v156 = vunpack.c.l.b16 %v85
    %v157 = vunpack.c.l.b16 %v86
    %v158 = vunpack.c.l.b16 %v87
    %v159 = vunpack.c.l.b16 %v88
    %v160 = vunpack.c.l.b16 %v89
    %v161 = vunpack.c.l.b16 %v90
    %v162 = vunpack.c.l.b16 %v91
    %v163 = vunpack.c.l.b16 %v92
    %v164 = vpack.c.b16 %v133, %v132
    %v165 = vpack.c.b16 %v135, %v134
    %v166 = vpack.c.b16 %v137, %v136
    %v167 = vpack.c.b16 %v139, %v138
    %v168 = vpack.c.b16 %v141, %v140
    %v169 = vpack.c.b16 %v143, %v142
    %v170 = vpack.c.b16 %v145, %v144
    %v171 = vpack.c.b16 %v147, %v146
    %v172 = vpack.c.b16 %v149, %v148
    %v173 = vpack.c.b16 %v151, %v150
    %v174 = vpack.c.b16 %v153, %v152
    %v175 = vpack.c.b16 %v155, %v154
    %v176 = vpack.c.b16 %v157, %v156
    %v177 = vpack.c.b16 %v159, %v158
    %v178 = vpack.c.b16 %v161, %v160
    %v179 = vpack.c.b16 %v163, %v162
    %196 = vmatprep.subr.bf16.mxu0 0
    %197 = vmatpush1.bf16.msra.mxu0 %v171
    %198 = vmatprep.subr.bf16.mxu0 0
    %199 = vmatpush1.bf16.msra.mxu0 %v170
    %200 = vmatprep.subr.bf16.mxu0 0
    %201 = vmatpush1.bf16.msra.mxu0 %v169
    %202 = vmatprep.subr.bf16.mxu0 0
    %203 = vmatpush1.bf16.msra.mxu0 %v168
    %204 = vmatprep.subr.bf16.mxu0 0
    %205 = vmatpush1.bf16.msra.mxu0 %v167
    %206 = vmatprep.subr.bf16.mxu0 0
    %207 = vmatpush1.bf16.msra.mxu0 %v166
    %208 = vmatprep.subr.bf16.mxu0 0
    %209 = vmatpush1.bf16.msra.mxu0 %v165
    %210 = vmatprep.subr.bf16.mxu0 0
    %211 = vmatpush1.bf16.msra.mxu0 %v164
    %212 = vmatprep.subr.bf16.mxu0 0
    %213 = vmatpush2.bf16.msra.mxu0 %v179
    %214 = vmatprep.subr.bf16.mxu0 0
    %215 = vmatpush2.bf16.msra.mxu0 %v178
    %216 = vmatprep.subr.bf16.mxu0 0
    %217 = vmatpush2.bf16.msra.mxu0 %v177
    %218 = vmatprep.subr.bf16.mxu0 0
    %219 = vmatpush2.bf16.msra.mxu0 %v176
    %220 = vmatprep.subr.bf16.mxu0 0
    %221 = vmatpush2.bf16.msra.mxu0 %v175
    %222 = vmatprep.subr.bf16.mxu0 0
    %223 = vmatpush2.bf16.msra.mxu0 %v174
    %224 = vmatprep.subr.bf16.mxu0 0
    %225 = vmatpush2.bf16.msra.mxu0 %v173
    %226 = vmatprep.subr.bf16.mxu0 0
    %227 = vmatpush2.bf16.msra.mxu0 %v172
    %228 = vmatprep.mubr.bf16.mxu0 %v60
    %229 = vmatmul.mubr.bf16.gmra.mxu0 %v59
    %v230 = vpop.f32.mrf.mxu0
    %v231 = vadd.f32 %v98, %v230
    %v232 = vpop.f32.mrf.mxu0
    %v233 = vpop.f32.mrf.mxu0
    %v234 = vadd.f32 %v98, %v233
    %v235 = vpop.f32.mrf.mxu0
    %236 = vdwg.mxu0
    %v237 = vmax.f32 %v231, 0.0
    %v238 = vmax.f32 %v234, 0.0
    %v239 = vpack.c.bf16 %v238, %v237
    %v240 = vld [vmem:[%s3] sm:$0xf]
    %v241 = vld [vmem:[%s3 + $0x4] sm:$0xf]
    %v242 = vld [vmem:[%s3 + $0x8] sm:$0xf]
    %v243 = vld [vmem:[%s3 + $0xc] sm:$0xf]
    %v244 = vld [vmem:[%s3 + $0x10] sm:$0xf]
    %v245 = vld [vmem:[%s3 + $0x14] sm:$0xf]
    %v246 = vld [vmem:[%s3 + $0x18] sm:$0xf]
    %v247 = vld [vmem:[%s3 + $0x1c] sm:$0xf]
    %v248 = vld [vmem:[%s3 + $0x20] sm:$0xf]
    %v249 = vld [vmem:[%s3 + $0x24] sm:$0xf]
    %v250 = vld [vmem:[%s3 + $0x28] sm:$0xf]
    %v251 = vld [vmem:[%s3 + $0x2c] sm:$0xf]
    %v252 = vld [vmem:[%s3 + $0x30] sm:$0xf]
    %v253 = vld [vmem:[%s3 + $0x34] sm:$0xf]
    %v254 = vld [vmem:[%s3 + $0x38] sm:$0xf]
    %v255 = vld [vmem:[%s3 + $0x3c] sm:$0xf]
    %v256 = vld [vmem:[%s4] sm:$0x1]
    %v258 = vlaneseq
    %v259 = vshrl.u32 %v258, 7
    %v260 = vsub.s32 0, %v259
    %v261 = vrot.slane %v256, %v260
    %v279 = vunpack.c.l.b16 %v240
    %v280 = vunpack.c.l.b16 %v241
    %v281 = vunpack.c.l.b16 %v242
    %v282 = vunpack.c.l.b16 %v243
    %v283 = vunpack.c.l.b16 %v244
    %v284 = vunpack.c.l.b16 %v245
    %v285 = vunpack.c.l.b16 %v246
    %v286 = vunpack.c.l.b16 %v247
    %v287 = vunpack.c.l.b16 %v248
    %v288 = vunpack.c.l.b16 %v249
    %v289 = vunpack.c.l.b16 %v250
    %v290 = vunpack.c.l.b16 %v251
    %v291 = vunpack.c.l.b16 %v252
    %v292 = vunpack.c.l.b16 %v253
    %v293 = vunpack.c.l.b16 %v254
    %v294 = vunpack.c.l.b16 %v255
    %v295 = vpack.c.b16 %v280, %v279
    %v296 = vpack.c.b16 %v282, %v281
    %v297 = vpack.c.b16 %v284, %v283
    %v298 = vpack.c.b16 %v286, %v285
    %v299 = vpack.c.b16 %v288, %v287
    %v300 = vpack.c.b16 %v290, %v289
    %v301 = vpack.c.b16 %v292, %v291
    %v302 = vpack.c.b16 %v294, %v293
    %311 = vmatprep.subr.bf16.mxu0 0
    %312 = vmatpush1.bf16.msra.mxu0 %v302
    %313 = vmatprep.subr.bf16.mxu0 0
    %314 = vmatpush1.bf16.msra.mxu0 %v301
    %315 = vmatprep.subr.bf16.mxu0 0
    %316 = vmatpush1.bf16.msra.mxu0 %v300
    %317 = vmatprep.subr.bf16.mxu0 0
    %318 = vmatpush1.bf16.msra.mxu0 %v299
    %319 = vmatprep.subr.bf16.mxu0 0
    %320 = vmatpush1.bf16.msra.mxu0 %v298
    %321 = vmatprep.subr.bf16.mxu0 0
    %322 = vmatpush1.bf16.msra.mxu0 %v297
    %323 = vmatprep.subr.bf16.mxu0 0
    %324 = vmatpush1.bf16.msra.mxu0 %v296
    %325 = vmatprep.subr.bf16.mxu0 0
    %326 = vmatpush1.bf16.msra.mxu0 %v295
    %327 = vmatprep.subr.bf16.mxu0 0
    %328 = vmatpush2.bf16.msra.mxu0 0
    %329 = vmatprep.subr.bf16.mxu0 0
    %330 = vmatpush2.bf16.msra.mxu0 0
    %331 = vmatprep.subr.bf16.mxu0 0
    %332 = vmatpush2.bf16.msra.mxu0 0
    %333 = vmatprep.subr.bf16.mxu0 0
    %334 = vmatpush2.bf16.msra.mxu0 0
    %335 = vmatprep.subr.bf16.mxu0 0
    %336 = vmatpush2.bf16.msra.mxu0 0
    %337 = vmatprep.subr.bf16.mxu0 0
    %338 = vmatpush2.bf16.msra.mxu0 0
    %339 = vmatprep.subr.bf16.mxu0 0
    %340 = vmatpush2.bf16.msra.mxu0 0
    %341 = vmatprep.subr.bf16.mxu0 0
    %342 = vmatpush2.bf16.msra.mxu0 0
    %343 = vmatprep.mubr.bf16.mxu0 0
    %344 = vmatmul.mubr.bf16.gmra.mxu0 %v239
    %v345 = vpop.f32.mrf.mxu0
    %v346 = vadd.f32 %v261, %v345
    %v347 = vpop.f32.mrf.mxu0
    %v348 = vpop.f32.mrf.mxu0
    %v349 = vadd.f32 %v261, %v348
    %v350 = vpop.f32.mrf.mxu0
    %351 = vdwg.mxu0
    %v352 = vmax.f32 %v346, 0.0
    %v353 = vmax.f32 %v349, 0.0
    %v354 = vpack.c.bf16 %v353, %v352
    %v355 = vld [vmem:[%s5] sm:$0xf]
    %v356 = vld [vmem:[%s5 + $0x4] sm:$0xf]
    %v357 = vld [vmem:[%s5 + $0x8] sm:$0xf]
    %v358 = vld [vmem:[%s5 + $0xc] sm:$0xf]
    %v359 = vld [vmem:[%s5 + $0x10] sm:$0xf]
    %v360 = vld [vmem:[%s5 + $0x14] sm:$0xf]
    %v361 = vld [vmem:[%s5 + $0x18] sm:$0xf]
    %v362 = vld [vmem:[%s5 + $0x1c] sm:$0xf]
    %v363 = vld [vmem:[%s5 + $0x20] sm:$0xf]
    %v364 = vld [vmem:[%s5 + $0x24] sm:$0xf]
    %v365 = vld [vmem:[%s5 + $0x28] sm:$0xf]
    %v366 = vld [vmem:[%s5 + $0x2c] sm:$0xf]
    %v367 = vld [vmem:[%s5 + $0x30] sm:$0xf]
    %v368 = vld [vmem:[%s5 + $0x34] sm:$0xf]
    %v369 = vld [vmem:[%s5 + $0x38] sm:$0xf]
    %v370 = vld [vmem:[%s5 + $0x3c] sm:$0xf]
    %v371 = vld [vmem:[%s6] sm:$0x1]
    %v373 = vlaneseq
    %v374 = vshrl.u32 %v373, 7
    %v375 = vsub.s32 0, %v374
    %v376 = vrot.slane %v371, %v375
    %v394 = vunpack.c.l.b16 %v355
    %v395 = vunpack.c.l.b16 %v356
    %v396 = vunpack.c.l.b16 %v357
    %v397 = vunpack.c.l.b16 %v358
    %v398 = vunpack.c.l.b16 %v359
    %v399 = vunpack.c.l.b16 %v360
    %v400 = vunpack.c.l.b16 %v361
    %v401 = vunpack.c.l.b16 %v362
    %v402 = vunpack.c.l.b16 %v363
    %v403 = vunpack.c.l.b16 %v364
    %v404 = vunpack.c.l.b16 %v365
    %v405 = vunpack.c.l.b16 %v366
    %v406 = vunpack.c.l.b16 %v367
    %v407 = vunpack.c.l.b16 %v368
    %v408 = vunpack.c.l.b16 %v369
    %v409 = vunpack.c.l.b16 %v370
    %v410 = vpack.c.b16 %v395, %v394
    %v411 = vpack.c.b16 %v397, %v396
    %v412 = vpack.c.b16 %v399, %v398
    %v413 = vpack.c.b16 %v401, %v400
    %v414 = vpack.c.b16 %v403, %v402
    %v415 = vpack.c.b16 %v405, %v404
    %v416 = vpack.c.b16 %v407, %v406
    %v417 = vpack.c.b16 %v409, %v408
    %426 = vmatprep.subr.bf16.mxu0 0
    %427 = vmatpush1.bf16.msra.mxu0 %v417
    %428 = vmatprep.subr.bf16.mxu0 0
    %429 = vmatpush1.bf16.msra.mxu0 %v416
    %430 = vmatprep.subr.bf16.mxu0 0
    %431 = vmatpush1.bf16.msra.mxu0 %v415
    %432 = vmatprep.subr.bf16.mxu0 0
    %433 = vmatpush1.bf16.msra.mxu0 %v414
    %434 = vmatprep.subr.bf16.mxu0 0
    %435 = vmatpush1.bf16.msra.mxu0 %v413
    %436 = vmatprep.subr.bf16.mxu0 0
    %437 = vmatpush1.bf16.msra.mxu0 %v412
    %438 = vmatprep.subr.bf16.mxu0 0
    %439 = vmatpush1.bf16.msra.mxu0 %v411
    %440 = vmatprep.subr.bf16.mxu0 0
    %441 = vmatpush1.bf16.msra.mxu0 %v410
    %442 = vmatprep.subr.bf16.mxu0 0
    %443 = vmatpush2.bf16.msra.mxu0 0
    %444 = vmatprep.subr.bf16.mxu0 0
    %445 = vmatpush2.bf16.msra.mxu0 0
    %446 = vmatprep.subr.bf16.mxu0 0
    %447 = vmatpush2.bf16.msra.mxu0 0
    %448 = vmatprep.subr.bf16.mxu0 0
    %449 = vmatpush2.bf16.msra.mxu0 0
    %450 = vmatprep.subr.bf16.mxu0 0
    %451 = vmatpush2.bf16.msra.mxu0 0
    %452 = vmatprep.subr.bf16.mxu0 0
    %453 = vmatpush2.bf16.msra.mxu0 0
    %454 = vmatprep.subr.bf16.mxu0 0
    %455 = vmatpush2.bf16.msra.mxu0 0
    %456 = vmatprep.subr.bf16.mxu0 0
    %457 = vmatpush2.bf16.msra.mxu0 0
    %458 = vmatprep.mubr.bf16.mxu0 0
    %459 = vmatmul.mubr.bf16.gmra.mxu0 %v354
    %v460 = vpop.f32.mrf.mxu0
    %v461 = vadd.f32 %v376, %v460
    %v462 = vpop.f32.mrf.mxu0
    %v463 = vpop.f32.mrf.mxu0
    %v464 = vadd.f32 %v376, %v463
    %v465 = vpop.f32.mrf.mxu0
    %466 = vdwg.mxu0
    %vm467 = vcmask 15360
    %468 = vst.msk [vmem:[%s7] sm:$0xff] %vm467, %v461
    %469 = vst.msk [vmem:[%s7 + $0x8] sm:$0xff] %vm467, %v464
    // Predicated region
    $region38: #{dann_domain_classifier.1} parent=1 // pred_check
      _
    $region39: #{dann_domain_classifier.1} parent=1 // pred_check_branch
      %471 = sbr.rel (0) target = $region41
    $region40: #{dann_domain_classifier.1} parent=1 // pred_region
      _
    $region41: #{dann_domain_classifier.1} parent=1 // pred_fallthru
      _
    // Predicated region
    $region42: #{dann_domain_classifier.1} parent=1 // pred_check
      _
    $region43: #{dann_domain_classifier.1} parent=1 // pred_check_branch
      %473 = sbr.rel (0) target = $region45
    $region44: #{dann_domain_classifier.1} parent=1 // pred_region
      _
    $region45: #{dann_domain_classifier.1} parent=1 // pred_fallthru
      _
    %474 = vsyncpa [#allocation3], 1
    %475 = vsyncpa [#allocation5], 1

</llo_original>
